<compile_context>
chip_gen: v7x
topology: tpu7x:2x2x1
jax: 0.10.0
libtpu: 0.0.40
codegen_flags: <defaults>
</compile_context>

<pallas_src>
import functools
import math

import jax
import jax.numpy as jnp
from jax.experimental import pallas as pl
from jax.experimental.pallas import tpu as pltpu


NEG_INF = -1e30


def _attention_add_kernel(
    # inputs
    query_ref, x_ref,
    wq_ref, bq_ref,          # q projection (b_in already folded into bq)
    wkv_ref, bkv_ref,        # fused, lane-padded K|V projection (D, 2*Hp)
    wout_ref,                # W_out weight as a (1, Hp) row vector (VPU mul + reduce)
    wo_ref, bo_ref,          # output projection (kept f32)
    bout_ref,                # W_out bias, (1,) scalar in SMEM
    # outputs
    o_ref, a_ref,            # a_ref: resident (nt, bb, bt) block of raw scores
    # scratch
    q_scratch, m_scratch, l_scratch, acc_scratch,
    *, seq_len):
    t = pl.program_id(1)
    nt = pl.num_programs(1)
    block_b, block_t, d = x_ref.shape
    hp = wq_ref.shape[1]

    # ---- per-batch-block init (query projection hoisted out of the T loop) ----
    @pl.when(t == 0)
    def _init():
        q = jnp.dot(query_ref[...], wq_ref[...],
                    preferred_element_type=jnp.float32) + bq_ref[...]
        q_scratch[...] = q
        m_scratch[...] = jnp.full(m_scratch.shape, NEG_INF, m_scratch.dtype)
        l_scratch[...] = jnp.zeros(l_scratch.shape, l_scratch.dtype)
        acc_scratch[...] = jnp.zeros(acc_scratch.shape, acc_scratch.dtype)

    # ---- fused K|V projection: one large-M 2-D MXU contraction ----
    x2d = x_ref[...].reshape(block_b * block_t, d)
    kv = jnp.dot(x2d, wkv_ref[...], preferred_element_type=jnp.float32)
    kv = kv.reshape(block_b, block_t, 2 * hp) + bkv_ref[...]
    k = kv[:, :, :hp]        # tile-aligned split (hp is a multiple of 128)
    v = kv[:, :, hp:]

    # ---- additive score: tanh(q + k + b_in); W_out as VPU mul + lane reduce ----
    h = jnp.tanh(q_scratch[...][:, None, :] + k)                    # (bb, bt, Hp)
    e = jnp.sum(h * wout_ref[...], axis=-1) + bout_ref[0]           # (bb, bt)

    # mask padded time steps
    t_ids = t * block_t + jax.lax.broadcasted_iota(jnp.int32, e.shape, 1)
    e = jnp.where(t_ids < seq_len, e, NEG_INF)

    # stash raw scores directly into the resident output block (no extra scratch)
    a_ref[t] = e

    # ---- online softmax over the "arbitrary" time-block axis ----
    m_prev = m_scratch[...]
    m_new = jnp.maximum(m_prev, jnp.max(e, axis=-1, keepdims=True))
    alpha = jnp.exp(m_prev - m_new)
    p = jnp.exp(e - m_new)
    l_scratch[...] = alpha * l_scratch[...] + jnp.sum(p, axis=-1, keepdims=True)
    # context accumulation on VPU/XLU (avoids a degenerate M=1 MXU matmul)
    # TODO(synk): on v7x measure whether a batched dot_general wins here.
    acc_scratch[...] = alpha * acc_scratch[...] + jnp.sum(p[:, :, None] * v, axis=1)
    m_scratch[...] = m_new

    # ---- finalize: output projection + in-place normalization of `a` ----
    @pl.when(t == nt - 1)
    def _finalize():
        inv_l = 1.0 / l_scratch[...]                                # exact (runs once)
        ctx = acc_scratch[...] * inv_l                              # (bb, Hp), f32
        o = jnp.dot(ctx, wo_ref[...],
                    preferred_element_type=jnp.float32) + bo_ref[...]
        o_ref[...] = o.astype(o_ref.dtype)
        a_ref[...] = (jnp.exp(a_ref[...] - m_scratch[...][None])
                      * inv_l[None]).astype(a_ref.dtype)


def _round_up(x, m):
    return ((x + m - 1) // m) * m


@functools.partial(jax.jit, static_argnames=("block_b", "block_t", "matmul_dtype"))
def attention_forward(query, x, params, *, block_b=8, block_t=1024,
                      matmul_dtype=jnp.bfloat16):
    """Forward pass of the 'add' + softmax Attention (eval mode)."""
    B, T, D = x.shape
    H = params['wq'].shape[1]
    O = params['wo'].shape[1]
    Hp = _round_up(H, 128)                               # lane-tile aligned hidden dim

    # batch block (sublane aligned); keep >=2 batch blocks when B allows (megacore)
    bb = max(8, (min(int(block_b), _round_up(B, 8)) // 8) * 8)
    if B > 8 and pl.cdiv(B, bb) < 2:
        bb = max(8, _round_up(pl.cdiv(B, 2), 8))
    bt = max(8, (min(int(block_t), _round_up(T, 8)) // 8) * 8)
    Bp = pl.cdiv(B, bb) * bb
    Tp = pl.cdiv(T, bt) * bt
    nb = Bp // bb
    nt = Tp // bt

    mm = matmul_dtype

    # pad batch (sublanes) and time; stage matmul operands in bf16 by default
    qp = jnp.pad(query, ((0, Bp - B), (0, 0))).astype(mm)
    xp = jnp.pad(x, ((0, Bp - B), (0, Tp - T), (0, 0))).astype(mm)

    def pad_h(w):                       # pad the H (last) axis up to Hp with zeros
        return jnp.pad(w, ((0, 0), (0, Hp - H)))

    wq = pad_h(params['wq']).astype(mm)
    wkv = jnp.concatenate([pad_h(params['wk']), pad_h(params['wv'])],
                          axis=1).astype(mm)                                 # (D, 2Hp)
    bq = pad_h(params['bq'] + params['b_in'][0, 0]).astype(jnp.float32)      # fold b_in
    bkv = jnp.concatenate([pad_h(params['bk']), pad_h(params['bv'])],
                          axis=1).astype(jnp.float32)                        # (1, 2Hp)
    wout_row = pad_h(params['wout'].reshape(1, H)).astype(jnp.float32)       # (1, Hp)
    wo = jnp.pad(params['wo'], ((0, Hp - H), (0, 0))).astype(jnp.float32)    # keep f32
    bo = params['bo'].astype(jnp.float32)
    bout = params['bout'].reshape(1).astype(jnp.float32)                     # SMEM scalar

    kernel = functools.partial(_attention_add_kernel, seq_len=T)

    itemsize = jnp.dtype(mm).itemsize
    flops = (2 * Bp * Tp * D * 2 * Hp + 2 * Bp * D * Hp
             + 6 * Bp * Tp * Hp + 2 * Bp * Hp * O)
    transcendentals = Bp * Tp * (Hp + 3)
    bytes_accessed = ((qp.size + xp.size + wq.size + wkv.size) * itemsize
                      + (Bp * O + 2 * Bp * Tp + Hp * O + 5 * Hp + 2 * O) * 4)

    grid_spec = pltpu.PrefetchScalarGridSpec(
        num_scalar_prefetch=0,
        grid=(nb, nt),
        in_specs=[
            pl.BlockSpec((bb, D), lambda b, t: (b, 0)),            # query
            pl.BlockSpec((bb, bt, D), lambda b, t: (b, t, 0)),     # x (pipelined over T)
            pl.BlockSpec((D, Hp), lambda b, t: (0, 0)),            # W_q
            pl.BlockSpec((1, Hp), lambda b, t: (0, 0)),            # b_q (+ b_in)
            pl.BlockSpec((D, 2 * Hp), lambda b, t: (0, 0)),        # W_k|W_v fused
            pl.BlockSpec((1, 2 * Hp), lambda b, t: (0, 0)),        # b_k|b_v fused
            pl.BlockSpec((1, Hp), lambda b, t: (0, 0)),            # W_out row vector
            pl.BlockSpec((Hp, O), lambda b, t: (0, 0)),            # output weight (f32)
            pl.BlockSpec((1, O), lambda b, t: (0, 0)),             # output bias
            pl.BlockSpec(memory_space=pltpu.MemorySpace.SMEM),     # W_out bias scalar
        ],
        out_specs=[
            pl.BlockSpec((bb, O), lambda b, t: (b, 0)),            # o (resident over t)
            pl.BlockSpec((nt, bb, bt), lambda b, t: (0, b, 0)),    # a raw/normalized
        ],
        scratch_shapes=[
            pltpu.VMEM((bb, Hp), jnp.float32),       # q + biases (hoisted)
            pltpu.VMEM((bb, 1), jnp.float32),        # running max
            pltpu.VMEM((bb, 1), jnp.float32),        # running denominator
            pltpu.VMEM((bb, Hp), jnp.float32),       # context accumulator
        ],
    )

    o_p, a_raw = pl.pallas_call(
        kernel,
        grid_spec=grid_spec,
        out_shape=(jax.ShapeDtypeStruct((Bp, O), jnp.float32),
                   jax.ShapeDtypeStruct((nt, Bp, bt), jnp.float32)),
        compiler_params=pltpu.CompilerParams(
            dimension_semantics=("parallel", "arbitrary"),
            vmem_limit_bytes=48 * 1024 * 1024),
        cost_estimate=pl.CostEstimate(flops=flops,
                                      transcendentals=transcendentals,
                                      bytes_accessed=bytes_accessed),
    )(qp, xp, wq, bq, wkv, bkv, wout_row, wo, bo, bout)

    if nt == 1:
        a_full = a_raw[0]
    else:
        a_full = jnp.transpose(a_raw, (1, 0, 2)).reshape(Bp, Tp)
    return o_p[:B], a_full[:B, :T]


def init_params(key, attention_input_dim, attention_hidden_dim, output_dim):
    """Deterministic kaiming-uniform-like init (bound = 1/sqrt(fan_in)), like torch Linear."""
    D, H, O = attention_input_dim, attention_hidden_dim, output_dim

    def lin(k, fan_in, fan_out):
        kw, kb = jax.random.split(k)
        bound = 1.0 / math.sqrt(fan_in)
        w = jax.random.uniform(kw, (fan_in, fan_out), jnp.float32, -bound, bound)
        b = jax.random.uniform(kb, (1, fan_out), jnp.float32, -bound, bound)
        return w, b

    k1, k2, k3, k4, k5 = jax.random.split(key, 5)
    wq, bq = lin(k1, D, H)
    wk, bk = lin(k2, D, H)
    wv, bv = lin(k3, D, H)
    wout, bout = lin(k4, H, 1)     # W_out: Linear(H, 1)
    wo, bo = lin(k5, H, O)         # output: Linear(H, O)
    b_in = jnp.zeros((1, 1), jnp.float32)   # nn.Parameter(torch.zeros(1))
    return dict(wq=wq, bq=bq, wk=wk, bk=bk, wv=wv, bv=bv,
                wout=wout, bout=bout, b_in=b_in, wo=wo, bo=bo)


def attention_reference(query, x, p):
    """Pure-JAX reference of the 'add' + softmax forward path."""
    q = query @ p['wq'] + p['bq']
    k = jnp.einsum('btd,dh->bth', x, p['wk']) + p['bk'][None]
    v = jnp.einsum('btd,dh->bth', x, p['wv']) + p['bv'][None]
    h = jnp.tanh(q[:, None, :] + k + p['b_in'][0, 0])
    e = (jnp.einsum('bth,ho->bto', h, p['wout'])[..., 0]) + p['bout'][0, 0]
    a = jax.nn.softmax(e, axis=1)
    ctx = jnp.einsum('bt,bth->bh', a, v)
    o = ctx @ p['wo'] + p['bo']
    return o, a


if __name__ == "__main__":
    D, H, O = 32, 32, 16

    def run_case(name, B, T, block_b, block_t, mm_dtype, atol, rtol, key):
        kq, kx, kp = jax.random.split(key, 3)
        query = jax.random.normal(kq, (B, D), jnp.float32)
        x = jax.random.normal(kx, (B, T, D), jnp.float32)
        params = init_params(kp, D, H, O)

        o, a = attention_forward(query, x, params, block_b=block_b,
                                 block_t=block_t, matmul_dtype=mm_dtype)
        o = jax.block_until_ready(o)
        a = jax.block_until_ready(a)

        o_ref, a_ref = attention_reference(query, x, params)
        assert o.shape == (B, O) and a.shape == (B, T), name
        assert bool(jnp.allclose(jnp.sum(a, axis=1), 1.0, atol=1e-3)), name
        assert bool(jnp.allclose(o, o_ref, atol=atol, rtol=rtol)), name
        assert bool(jnp.allclose(a, a_ref, atol=atol, rtol=rtol)), name

    key = jax.random.PRNGKey(0)
    k1, k2, k3 = jax.random.split(key, 3)

    # primary small case (single grid step), f32, strict tolerance
    run_case("f32_single_block", B=2, T=8, block_b=8, block_t=128,
             mm_dtype=jnp.float32, atol=2e-5, rtol=2e-5, key=k1)
    # multi-block grid: 2 batch blocks x 2 time blocks, batch+time padding,
    # resident-`a` multi-block write + wrapper transpose path exercised
    run_case("f32_gridded", B=10, T=12, block_b=8, block_t=8,
             mm_dtype=jnp.float32, atol=2e-5, rtol=2e-5, key=k2)
    # default bf16 MXU staging path (f32 accumulation / f32 softmax), relaxed tolerance
    run_case("bf16_mxu", B=2, T=8, block_b=8, block_t=1024,
             mm_dtype=jnp.bfloat16, atol=5e-2, rtol=5e-2, key=k3)

    print("KERNEL_OK")
</pallas_src>

<mosaic_0001>
module attributes {stable_mosaic.version = 11 : i64} {
  func.func @_attention_add_kernel(%arg0: i32, %arg1: i32, %arg2: memref<8x32xf32, #tpu.memory_space<vmem>>, %arg3: memref<8x8x32xf32, #tpu.memory_space<vmem>>, %arg4: memref<32x128xf32, #tpu.memory_space<vmem>>, %arg5: memref<1x128xf32, #tpu.memory_space<vmem>>, %arg6: memref<32x256xf32, #tpu.memory_space<vmem>>, %arg7: memref<1x256xf32, #tpu.memory_space<vmem>>, %arg8: memref<1x128xf32, #tpu.memory_space<vmem>>, %arg9: memref<128x16xf32, #tpu.memory_space<vmem>>, %arg10: memref<1x16xf32, #tpu.memory_space<vmem>>, %arg11: memref<1xf32, #tpu.memory_space<smem>>, %arg12: memref<8x16xf32, #tpu.memory_space<vmem>>, %arg13: memref<1x8x8xf32, #tpu.memory_space<vmem>>, %arg14: memref<8x128xf32, #tpu.memory_space<vmem>>, %arg15: memref<8x1xf32, #tpu.memory_space<vmem>>, %arg16: memref<8x1xf32, #tpu.memory_space<vmem>>, %arg17: memref<8x128xf32, #tpu.memory_space<vmem>>) attributes {dimension_semantics = [#tpu.dimension_semantics<parallel>, #tpu.dimension_semantics<arbitrary>], iteration_bounds = array<i64: 1, 1>, scalar_prefetch = 0 : i64, scratch_operands = 4 : i64, tpu.core_type = #tpu.core_type<tc>, window_params = [{transform_indices = @transform_0, window_bounds = array<i64: 8, 32>}, {transform_indices = @transform_1, window_bounds = array<i64: 8, 8, 32>}, {pipeline_mode = #tpu.pipeline_mode<synchronous>, transform_indices = @transform_2, window_bounds = array<i64: 32, 128>}, {pipeline_mode = #tpu.pipeline_mode<synchronous>, transform_indices = @transform_3, window_bounds = array<i64: 1, 128>}, {pipeline_mode = #tpu.pipeline_mode<synchronous>, transform_indices = @transform_4, window_bounds = array<i64: 32, 256>}, {pipeline_mode = #tpu.pipeline_mode<synchronous>, transform_indices = @transform_5, window_bounds = array<i64: 1, 256>}, {pipeline_mode = #tpu.pipeline_mode<synchronous>, transform_indices = @transform_6, window_bounds = array<i64: 1, 128>}, {pipeline_mode = #tpu.pipeline_mode<synchronous>, transform_indices = @transform_7, window_bounds = array<i64: 128, 16>}, {pipeline_mode = #tpu.pipeline_mode<synchronous>, transform_indices = @transform_8, window_bounds = array<i64: 1, 16>}, {transform_indices = @transform_9, window_bounds = array<i64: 1>}, {transform_indices = @transform_10, window_bounds = array<i64: 8, 16>}, {transform_indices = @transform_11, window_bounds = array<i64: 1, 8, 8>}]} {
    %c0_i32 = arith.constant 0 : i32
    %0 = arith.cmpi eq, %arg1, %c0_i32 : i32
    %1 = arith.extui %0 : i1 to i32
    %c0_i32_0 = arith.constant 0 : i32
    %2 = arith.cmpi ne, %1, %c0_i32_0 : i32
    scf.if %2 {
      %c0_34 = arith.constant 0 : index
      %c0_35 = arith.constant 0 : index
      %67 = vector.load %arg2[%c0_34, %c0_35] : memref<8x32xf32, #tpu.memory_space<vmem>>, vector<8x32xf32>
      %c0_36 = arith.constant 0 : index
      %c0_37 = arith.constant 0 : index
      %68 = vector.load %arg4[%c0_36, %c0_37] : memref<32x128xf32, #tpu.memory_space<vmem>>, vector<32x128xf32>
      %cst_38 = arith.constant dense<0.000000e+00> : vector<8x128xf32>
      %69 = tpu.matmul %67, %68, %cst_38 {dimension_numbers = #tpu.dot_dimension_numbers<[1], [0], [0], [1], [0, 0, 1, 1], [], []>} : vector<8x32xf32>, vector<32x128xf32>, vector<8x128xf32> -> vector<8x128xf32>
      %c0_39 = arith.constant 0 : index
      %c0_40 = arith.constant 0 : index
      %70 = vector.load %arg5[%c0_39, %c0_40] : memref<1x128xf32, #tpu.memory_space<vmem>>, vector<1x128xf32>
      %71 = vector.broadcast %70 : vector<1x128xf32> to vector<8x128xf32>
      %72 = arith.addf %69, %71 : vector<8x128xf32>
      %c0_41 = arith.constant 0 : index
      %c0_42 = arith.constant 0 : index
      %73 = vector.load %arg14[%c0_41, %c0_42] : memref<8x128xf32, #tpu.memory_space<vmem>>, vector<8x128xf32>
      tpu.vector_store %arg14[%c0_41, %c0_42], %72 {strides = array<i32>} : memref<8x128xf32, #tpu.memory_space<vmem>>, vector<8x128xf32>,
      %cst_43 = arith.constant -1.000000e+30 : f32
      %74 = vector.broadcast %cst_43 : f32 to vector<8x1xf32>
      %c0_44 = arith.constant 0 : index
      %c0_45 = arith.constant 0 : index
      %75 = vector.load %arg15[%c0_44, %c0_45] : memref<8x1xf32, #tpu.memory_space<vmem>>, vector<8x1xf32>
      tpu.vector_store %arg15[%c0_44, %c0_45], %74 {strides = array<i32>} : memref<8x1xf32, #tpu.memory_space<vmem>>, vector<8x1xf32>,
      %cst_46 = arith.constant 0.000000e+00 : f32
      %76 = vector.broadcast %cst_46 : f32 to vector<8x1xf32>
      %c0_47 = arith.constant 0 : index
      %c0_48 = arith.constant 0 : index
      %77 = vector.load %arg16[%c0_47, %c0_48] : memref<8x1xf32, #tpu.memory_space<vmem>>, vector<8x1xf32>
      tpu.vector_store %arg16[%c0_47, %c0_48], %76 {strides = array<i32>} : memref<8x1xf32, #tpu.memory_space<vmem>>, vector<8x1xf32>,
      %cst_49 = arith.constant 0.000000e+00 : f32
      %78 = vector.broadcast %cst_49 : f32 to vector<8x128xf32>
      %c0_50 = arith.constant 0 : index
      %c0_51 = arith.constant 0 : index
      %79 = vector.load %arg17[%c0_50, %c0_51] : memref<8x128xf32, #tpu.memory_space<vmem>>, vector<8x128xf32>
      tpu.vector_store %arg17[%c0_50, %c0_51], %78 {strides = array<i32>} : memref<8x128xf32, #tpu.memory_space<vmem>>, vector<8x128xf32>,
    } else {
    }
    %c0 = arith.constant 0 : index
    %c0_1 = arith.constant 0 : index
    %c0_2 = arith.constant 0 : index
    %3 = vector.load %arg3[%c0, %c0_1, %c0_2] : memref<8x8x32xf32, #tpu.memory_space<vmem>>, vector<8x8x32xf32>
    %4 = vector.shape_cast %3 : vector<8x8x32xf32> to vector<64x32xf32>
    %c0_3 = arith.constant 0 : index
    %c0_4 = arith.constant 0 : index
    %5 = vector.load %arg6[%c0_3, %c0_4] : memref<32x256xf32, #tpu.memory_space<vmem>>, vector<32x256xf32>
    %cst = arith.constant dense<0.000000e+00> : vector<64x256xf32>
    %6 = tpu.matmul %4, %5, %cst {dimension_numbers = #tpu.dot_dimension_numbers<[1], [0], [0], [1], [0, 0, 1, 1], [], []>} : vector<64x32xf32>, vector<32x256xf32>, vector<64x256xf32> -> vector<64x256xf32>
    %7 = vector.shape_cast %6 : vector<64x256xf32> to vector<8x8x256xf32>
    %c0_5 = arith.constant 0 : index
    %c0_6 = arith.constant 0 : index
    %8 = vector.load %arg7[%c0_5, %c0_6] : memref<1x256xf32, #tpu.memory_space<vmem>>, vector<1x256xf32>
    %9 = vector.shape_cast %8 : vector<1x256xf32> to vector<1x1x256xf32>
    %10 = vector.broadcast %9 : vector<1x1x256xf32> to vector<8x8x256xf32>
    %11 = arith.addf %7, %10 : vector<8x8x256xf32>
    %12 = vector.extract_strided_slice %11 {offsets = [0, 0, 0], sizes = [8, 8, 128], strides = [1, 1, 1]} : vector<8x8x256xf32> to vector<8x8x128xf32>
    %13 = vector.extract_strided_slice %11 {offsets = [0, 0, 128], sizes = [8, 8, 128], strides = [1, 1, 1]} : vector<8x8x256xf32> to vector<8x8x128xf32>
    %c0_7 = arith.constant 0 : index
    %c0_8 = arith.constant 0 : index
    %14 = vector.load %arg14[%c0_7, %c0_8] : memref<8x128xf32, #tpu.memory_space<vmem>>, vector<8x128xf32>
    %15 = vector.shape_cast %14 : vector<8x128xf32> to vector<8x1x128xf32>
    %16 = vector.broadcast %15 : vector<8x1x128xf32> to vector<8x8x128xf32>
    %17 = arith.addf %16, %12 : vector<8x8x128xf32>
    %18 = math.tanh %17 : vector<8x8x128xf32>
    %c0_9 = arith.constant 0 : index
    %c0_10 = arith.constant 0 : index
    %19 = vector.load %arg8[%c0_9, %c0_10] : memref<1x128xf32, #tpu.memory_space<vmem>>, vector<1x128xf32>
    %20 = vector.shape_cast %19 : vector<1x128xf32> to vector<1x1x128xf32>
    %21 = vector.broadcast %20 : vector<1x1x128xf32> to vector<8x8x128xf32>
    %22 = arith.mulf %18, %21 : vector<8x8x128xf32>
    %cst_11 = arith.constant dense<0.000000e+00> : vector<8x8xf32>
    %23 = vector.multi_reduction <add>, %22, %cst_11 [2] : vector<8x8x128xf32> to vector<8x8xf32>
    %c0_12 = arith.constant 0 : index
    %24 = memref.load %arg11[%c0_12] : memref<1xf32, #tpu.memory_space<smem>>
    %25 = vector.broadcast %24 : f32 to vector<8x8xf32>
    %26 = arith.addf %23, %25 : vector<8x8xf32>
    %c8_i32 = arith.constant 8 : i32
    %27 = arith.muli %arg1, %c8_i32 : i32
    %28 = tpu.iota {dimensions = array<i32: 1>} : vector<8x8xi32>
    %29 = vector.broadcast %27 : i32 to vector<8x8xi32>
    %30 = arith.addi %29, %28 : vector<8x8xi32>
    %c8_i32_13 = arith.constant 8 : i32
    %31 = vector.broadcast %c8_i32_13 : i32 to vector<8x8xi32>
    %32 = arith.cmpi slt, %30, %31 : vector<8x8xi32>
    %cst_14 = arith.constant -1.000000e+30 : f32
    %33 = vector.broadcast %cst_14 : f32 to vector<8x8xf32>
    %34 = arith.select %32, %26, %33 : vector<8x8xi1>, vector<8x8xf32>
    %35 = arith.index_cast %arg1 : i32 to index
    %c0_15 = arith.constant 0 : index
    %c0_16 = arith.constant 0 : index
    %36 = vector.load %arg13[%35, %c0_15, %c0_16] : memref<1x8x8xf32, #tpu.memory_space<vmem>>, vector<1x8x8xf32>
    %37 = vector.shape_cast %36 : vector<1x8x8xf32> to vector<8x8xf32>
    %38 = vector.shape_cast %34 : vector<8x8xf32> to vector<1x8x8xf32>
    tpu.vector_store %arg13[%35, %c0_15, %c0_16], %38 {strides = array<i32>} : memref<1x8x8xf32, #tpu.memory_space<vmem>>, vector<1x8x8xf32>,
    %c0_17 = arith.constant 0 : index
    %c0_18 = arith.constant 0 : index
    %39 = vector.load %arg15[%c0_17, %c0_18] : memref<8x1xf32, #tpu.memory_space<vmem>>, vector<8x1xf32>
    %cst_19 = arith.constant dense<0xFF800000> : vector<8xf32>
    %40 = vector.multi_reduction <maximumf>, %34, %cst_19 [1] : vector<8x8xf32> to vector<8xf32>
    %41 = vector.shape_cast %40 : vector<8xf32> to vector<8x1xf32>
    %42 = arith.maximumf %39, %41 : vector<8x1xf32>
    %43 = arith.subf %39, %42 : vector<8x1xf32>
    %44 = math.exp %43 : vector<8x1xf32>
    %45 = vector.broadcast %42 : vector<8x1xf32> to vector<8x8xf32>
    %46 = arith.subf %34, %45 : vector<8x8xf32>
    %47 = math.exp %46 : vector<8x8xf32>
    %c0_20 = arith.constant 0 : index
    %c0_21 = arith.constant 0 : index
    %48 = vector.load %arg16[%c0_20, %c0_21] : memref<8x1xf32, #tpu.memory_space<vmem>>, vector<8x1xf32>
    %49 = arith.mulf %44, %48 : vector<8x1xf32>
    %cst_22 = arith.constant dense<0.000000e+00> : vector<8xf32>
    %50 = vector.multi_reduction <add>, %47, %cst_22 [1] : vector<8x8xf32> to vector<8xf32>
    %51 = vector.shape_cast %50 : vector<8xf32> to vector<8x1xf32>
    %52 = arith.addf %49, %51 : vector<8x1xf32>
    %c0_23 = arith.constant 0 : index
    %c0_24 = arith.constant 0 : index
    %53 = vector.load %arg16[%c0_23, %c0_24] : memref<8x1xf32, #tpu.memory_space<vmem>>, vector<8x1xf32>
    tpu.vector_store %arg16[%c0_23, %c0_24], %52 {strides = array<i32>} : memref<8x1xf32, #tpu.memory_space<vmem>>, vector<8x1xf32>,
    %c0_25 = arith.constant 0 : index
    %c0_26 = arith.constant 0 : index
    %54 = vector.load %arg17[%c0_25, %c0_26] : memref<8x128xf32, #tpu.memory_space<vmem>>, vector<8x128xf32>
    %55 = vector.broadcast %44 : vector<8x1xf32> to vector<8x128xf32>
    %56 = arith.mulf %55, %54 : vector<8x128xf32>
    %57 = vector.shape_cast %47 : vector<8x8xf32> to vector<8x8x1xf32>
    %58 = vector.broadcast %57 : vector<8x8x1xf32> to vector<8x8x128xf32>
    %59 = arith.mulf %58, %13 : vector<8x8x128xf32>
    %cst_27 = arith.constant dense<0.000000e+00> : vector<8x128xf32>
    %60 = vector.multi_reduction <add>, %59, %cst_27 [1] : vector<8x8x128xf32> to vector<8x128xf32>
    %61 = arith.addf %56, %60 : vector<8x128xf32>
    %c0_28 = arith.constant 0 : index
    %c0_29 = arith.constant 0 : index
    %62 = vector.load %arg17[%c0_28, %c0_29] : memref<8x128xf32, #tpu.memory_space<vmem>>, vector<8x128xf32>
    tpu.vector_store %arg17[%c0_28, %c0_29], %61 {strides = array<i32>} : memref<8x128xf32, #tpu.memory_space<vmem>>, vector<8x128xf32>,
    %c0_30 = arith.constant 0 : index
    %c0_31 = arith.constant 0 : index
    %63 = vector.load %arg15[%c0_30, %c0_31] : memref<8x1xf32, #tpu.memory_space<vmem>>, vector<8x1xf32>
    tpu.vector_store %arg15[%c0_30, %c0_31], %42 {strides = array<i32>} : memref<8x1xf32, #tpu.memory_space<vmem>>, vector<8x1xf32>,
    %c0_i32_32 = arith.constant 0 : i32
    %64 = arith.cmpi eq, %arg1, %c0_i32_32 : i32
    %65 = arith.extui %64 : i1 to i32
    %c0_i32_33 = arith.constant 0 : i32
    %66 = arith.cmpi ne, %65, %c0_i32_33 : i32
    scf.if %66 {
      %c0_34 = arith.constant 0 : index
      %c0_35 = arith.constant 0 : index
      %67 = vector.load %arg16[%c0_34, %c0_35] : memref<8x1xf32, #tpu.memory_space<vmem>>, vector<8x1xf32>
      %cst_36 = arith.constant 1.000000e+00 : f32
      %68 = vector.broadcast %cst_36 : f32 to vector<8x1xf32>
      %69 = arith.divf %68, %67 : vector<8x1xf32>
      %c0_37 = arith.constant 0 : index
      %c0_38 = arith.constant 0 : index
      %70 = vector.load %arg17[%c0_37, %c0_38] : memref<8x128xf32, #tpu.memory_space<vmem>>, vector<8x128xf32>
      %71 = vector.broadcast %69 : vector<8x1xf32> to vector<8x128xf32>
      %72 = arith.mulf %70, %71 : vector<8x128xf32>
      %c0_39 = arith.constant 0 : index
      %c0_40 = arith.constant 0 : index
      %73 = vector.load %arg9[%c0_39, %c0_40] : memref<128x16xf32, #tpu.memory_space<vmem>>, vector<128x16xf32>
      %cst_41 = arith.constant dense<0.000000e+00> : vector<8x16xf32>
      %74 = tpu.matmul %72, %73, %cst_41 {dimension_numbers = #tpu.dot_dimension_numbers<[1], [0], [0], [1], [0, 0, 1, 1], [], []>} : vector<8x128xf32>, vector<128x16xf32>, vector<8x16xf32> -> vector<8x16xf32>
      %c0_42 = arith.constant 0 : index
      %c0_43 = arith.constant 0 : index
      %75 = vector.load %arg10[%c0_42, %c0_43] : memref<1x16xf32, #tpu.memory_space<vmem>>, vector<1x16xf32>
      %76 = vector.broadcast %75 : vector<1x16xf32> to vector<8x16xf32>
      %77 = arith.addf %74, %76 : vector<8x16xf32>
      %c0_44 = arith.constant 0 : index
      %c0_45 = arith.constant 0 : index
      %78 = vector.load %arg12[%c0_44, %c0_45] : memref<8x16xf32, #tpu.memory_space<vmem>>, vector<8x16xf32>
      tpu.vector_store %arg12[%c0_44, %c0_45], %77 {strides = array<i32>} : memref<8x16xf32, #tpu.memory_space<vmem>>, vector<8x16xf32>,
      %c0_46 = arith.constant 0 : index
      %c0_47 = arith.constant 0 : index
      %c0_48 = arith.constant 0 : index
      %79 = vector.load %arg13[%c0_46, %c0_47, %c0_48] : memref<1x8x8xf32, #tpu.memory_space<vmem>>, vector<1x8x8xf32>
      %c0_49 = arith.constant 0 : index
      %c0_50 = arith.constant 0 : index
      %80 = vector.load %arg15[%c0_49, %c0_50] : memref<8x1xf32, #tpu.memory_space<vmem>>, vector<8x1xf32>
      %81 = vector.shape_cast %80 : vector<8x1xf32> to vector<1x8x1xf32>
      %82 = vector.broadcast %81 : vector<1x8x1xf32> to vector<1x8x8xf32>
      %83 = arith.subf %79, %82 : vector<1x8x8xf32>
      %84 = math.exp %83 : vector<1x8x8xf32>
      %85 = vector.shape_cast %69 : vector<8x1xf32> to vector<1x8x1xf32>
      %86 = vector.broadcast %85 : vector<1x8x1xf32> to vector<1x8x8xf32>
      %87 = arith.mulf %84, %86 : vector<1x8x8xf32>
      %c0_51 = arith.constant 0 : index
      %c0_52 = arith.constant 0 : index
      %c0_53 = arith.constant 0 : index
      %88 = vector.load %arg13[%c0_51, %c0_52, %c0_53] : memref<1x8x8xf32, #tpu.memory_space<vmem>>, vector<1x8x8xf32>
      tpu.vector_store %arg13[%c0_51, %c0_52, %c0_53], %87 {strides = array<i32>} : memref<1x8x8xf32, #tpu.memory_space<vmem>>, vector<1x8x8xf32>,
    } else {
    }
    return
  }
  func.func @transform_0(%arg0: i32, %arg1: i32) -> (i32, i32) {
    %c0_i32 = arith.constant 0 : i32
    %c0_i32_0 = arith.constant 0 : i32
    return %arg0, %c0_i32 : i32, i32
  }
  func.func @transform_1(%arg0: i32, %arg1: i32) -> (i32, i32, i32) {
    %c0_i32 = arith.constant 0 : i32
    %c0_i32_0 = arith.constant 0 : i32
    return %arg0, %arg1, %c0_i32 : i32, i32, i32
  }
  func.func @transform_2(%arg0: i32, %arg1: i32) -> (i32, i32) {
    %c0_i32 = arith.constant 0 : i32
    %c0_i32_0 = arith.constant 0 : i32
    %c0_i32_1 = arith.constant 0 : i32
    return %c0_i32, %c0_i32_0 : i32, i32
  }
  func.func @transform_3(%arg0: i32, %arg1: i32) -> (i32, i32) {
    %c0_i32 = arith.constant 0 : i32
    %c0_i32_0 = arith.constant 0 : i32
    %c0_i32_1 = arith.constant 0 : i32
    return %c0_i32, %c0_i32_0 : i32, i32
  }
  func.func @transform_4(%arg0: i32, %arg1: i32) -> (i32, i32) {
    %c0_i32 = arith.constant 0 : i32
    %c0_i32_0 = arith.constant 0 : i32
    %c0_i32_1 = arith.constant 0 : i32
    return %c0_i32, %c0_i32_0 : i32, i32
  }
  func.func @transform_5(%arg0: i32, %arg1: i32) -> (i32, i32) {
    %c0_i32 = arith.constant 0 : i32
    %c0_i32_0 = arith.constant 0 : i32
    %c0_i32_1 = arith.constant 0 : i32
    return %c0_i32, %c0_i32_0 : i32, i32
  }
  func.func @transform_6(%arg0: i32, %arg1: i32) -> (i32, i32) {
    %c0_i32 = arith.constant 0 : i32
    %c0_i32_0 = arith.constant 0 : i32
    %c0_i32_1 = arith.constant 0 : i32
    return %c0_i32, %c0_i32_0 : i32, i32
  }
  func.func @transform_7(%arg0: i32, %arg1: i32) -> (i32, i32) {
    %c0_i32 = arith.constant 0 : i32
    %c0_i32_0 = arith.constant 0 : i32
    %c0_i32_1 = arith.constant 0 : i32
    return %c0_i32, %c0_i32_0 : i32, i32
  }
  func.func @transform_8(%arg0: i32, %arg1: i32) -> (i32, i32) {
    %c0_i32 = arith.constant 0 : i32
    %c0_i32_0 = arith.constant 0 : i32
    %c0_i32_1 = arith.constant 0 : i32
    return %c0_i32, %c0_i32_0 : i32, i32
  }
  func.func @transform_9(%arg0: i32, %arg1: i32) -> i32 {
    %c0_i32 = arith.constant 0 : i32
    %c0_i32_0 = arith.constant 0 : i32
    return %c0_i32 : i32
  }
  func.func @transform_10(%arg0: i32, %arg1: i32) -> (i32, i32) {
    %c0_i32 = arith.constant 0 : i32
    %c0_i32_0 = arith.constant 0 : i32
    return %arg0, %c0_i32 : i32, i32
  }
  func.func @transform_11(%arg0: i32, %arg1: i32) -> (i32, i32, i32) {
    %c0_i32 = arith.constant 0 : i32
    %c0_i32_0 = arith.constant 0 : i32
    %c0_i32_1 = arith.constant 0 : i32
    return %c0_i32, %arg0, %c0_i32_0 : i32, i32, i32
  }
}

</mosaic_0001>

<llo_original>
// kernel: attention_forward.1
$region0: #{attention_forward.1}
  #allocation0 [shape = 'u32[]', space=smem, size = 0x4, offset = 0x4, fixed_abs, tag = 'smem constant byte address 0x4 - core index']
  #allocation1 [shape = 'u32[144,128]{1,0:T(1,128)}', space=vmem, size = 0x12000, scoped, tag = 'internal scratch']
  #allocation2 [shape = 'f32[8,128]{1,0:T(8,128)}', space=vmem, size = 0x1000, scoped, tag = 'scratch operand']
  #allocation3 [shape = 'f32[8,1]{1,0:T(8,128)}', space=vmem, size = 0x1000, scoped, tag = 'scratch operand']
  #allocation4 [shape = 'f32[8,1]{1,0:T(8,128)}', space=vmem, size = 0x1000, scoped, tag = 'scratch operand']
  #allocation5 [shape = 'f32[8,128]{1,0:T(8,128)}', space=vmem, size = 0x1000, scoped, tag = 'scratch operand']
  #allocation6 [shape = 'f32[1]{0:T(128)S(6)}', space=smem, size = 0x200, scoped, tag = 'scoped memory for attention_forward.1']
  %s0 = inlined_call_operand.vmem [shape: f32[8,32], index: 0, kind: input, shape index: {}]
  %s1 = inlined_call_operand.vmem [shape: f32[8,8,32], index: 1, kind: input, shape index: {}]
  %s2 = inlined_call_operand.vmem [shape: f32[32,128], index: 2, kind: input, shape index: {}]
  %s3 = inlined_call_operand.vmem [shape: f32[1,128], index: 3, kind: input, shape index: {}]
  %s4 = inlined_call_operand.vmem [shape: f32[32,256], index: 4, kind: input, shape index: {}]
  %s5 = inlined_call_operand.vmem [shape: f32[1,256], index: 5, kind: input, shape index: {}]
  %s6 = inlined_call_operand.vmem [shape: f32[1,128], index: 6, kind: input, shape index: {}]
  %s7 = inlined_call_operand.vmem [shape: f32[128,16], index: 7, kind: input, shape index: {}]
  %s8 = inlined_call_operand.vmem [shape: f32[1,16], index: 8, kind: input, shape index: {}]
  %s9 = inlined_call_operand.<no memory space> [shape: f32[1], index: 9, kind: input, shape index: {}]
  %s10 = inlined_call_operand.vmem [shape: f32[8,16], index: 10, kind: output, shape index: {0}]
  %s11 = inlined_call_operand.vmem [shape: f32[1,8,8], index: 11, kind: output, shape index: {1}]
  %12 = xla_tuple %s10, %s11
  %s13 = sld [smem:[#allocation0]]
  $region66: #{attention_forward.1} parent=0
    _
  %s15 = ssub.s32 1, %s13
  %s16 = scalar_select 0, %s15, %s13
  %17 = sst [smem:[#allocation6]] %s9
  // Predicated region
  $region2: #{attention_forward.1} parent=0 // pred_check
    _
  $region3: #{attention_forward.1} parent=0 // pred_check_branch
    %19 = sbr.rel (0) target = $region5
  $region4: #{attention_forward.1} parent=0 // pred_region
    _
  $region5: #{attention_forward.1} parent=0 // pred_fallthru
    _
  // Predicated region
  $region6: #{attention_forward.1} parent=0 // pred_check
    _
  $region7: #{attention_forward.1} parent=0 // pred_check_branch
    %21 = sbr.rel (0) target = $region9
  $region8: #{attention_forward.1} parent=0 // pred_region
    _
  $region9: #{attention_forward.1} parent=0 // pred_fallthru
    _
  // Predicated region
  $region10: #{attention_forward.1} parent=0 // pred_check
    _
  $region11: #{attention_forward.1} parent=0 // pred_check_branch
    %23 = sbr.rel (0) target = $region13
  $region12: #{attention_forward.1} parent=0 // pred_region
    _
  $region13: #{attention_forward.1} parent=0 // pred_fallthru
    _
  // Predicated region
  $region14: #{attention_forward.1} parent=0 // pred_check
    _
  $region15: #{attention_forward.1} parent=0 // pred_check_branch
    %25 = sbr.rel (0) target = $region17
  $region16: #{attention_forward.1} parent=0 // pred_region
    _
  $region17: #{attention_forward.1} parent=0 // pred_fallthru
    _
  // Predicated region
  $region18: #{attention_forward.1} parent=0 // pred_check
    _
  $region19: #{attention_forward.1} parent=0 // pred_check_branch
    %27 = sbr.rel (0) target = $region21
  $region20: #{attention_forward.1} parent=0 // pred_region
    _
  $region21: #{attention_forward.1} parent=0 // pred_fallthru
    _
  // Predicated region
  $region22: #{attention_forward.1} parent=0 // pred_check
    _
  $region23: #{attention_forward.1} parent=0 // pred_check_branch
    %29 = sbr.rel (0) target = $region25
  $region24: #{attention_forward.1} parent=0 // pred_region
    _
  $region25: #{attention_forward.1} parent=0 // pred_fallthru
    _
  // Predicated region
  $region26: #{attention_forward.1} parent=0 // pred_check
    _
  $region27: #{attention_forward.1} parent=0 // pred_check_branch
    %31 = sbr.rel (0) target = $region29
  $region28: #{attention_forward.1} parent=0 // pred_region
    _
  $region29: #{attention_forward.1} parent=0 // pred_fallthru
    _
  // Predicated region
  $region30: #{attention_forward.1} parent=0 // pred_check
    _
  $region31: #{attention_forward.1} parent=0 // pred_check_branch
    %33 = sbr.rel (0) target = $region33
  $region32: #{attention_forward.1} parent=0 // pred_region
    _
  $region33: #{attention_forward.1} parent=0 // pred_fallthru
    _
  // Predicated region
  $region34: #{attention_forward.1} parent=0 // pred_check
    _
  $region35: #{attention_forward.1} parent=0 // pred_check_branch
    %35 = sbr.rel (0) target = $region37
  $region36: #{attention_forward.1} parent=0 // pred_region
    _
  $region37: #{attention_forward.1} parent=0 // pred_fallthru
    _
  // Predicated region
  $region38: #{attention_forward.1} parent=0 // pred_check
    _
  $region39: #{attention_forward.1} parent=0 // pred_check_branch
    %37 = sbr.rel (0) target = $region41
  $region40: #{attention_forward.1} parent=0 // pred_region
    _
  $region41: #{attention_forward.1} parent=0 // pred_fallthru
    _
  %p38 = scmp.eq.s32.totalorder 0, 0
  // Predicated region
  $region42: #{attention_forward.1} parent=0 // pred_check
    %p39 = pneg %p38
  $region43: #{attention_forward.1} parent=0 // pred_check_branch
    %41 = sbr.rel (%p39) target = $region45
  $region44: #{attention_forward.1} parent=0 // pred_region
    %v42 = vld [vmem:[%s0] sm:$0xff]
    %v43 = vld [vmem:[%s2] sm:$0xff]
    %v44 = vld [vmem:[%s2 + $0x8] sm:$0xff]
    %v45 = vld [vmem:[%s2 + $0x10] sm:$0xff]
    %v46 = vld [vmem:[%s2 + $0x18] sm:$0xff]
    %v47 = vld [vmem:[%s3] sm:$0x1]
    %v49 = vlaneseq
    %v50 = vshrl.u32 %v49, 7
    %v51 = vsub.s32 0, %v50
    %v52 = vrot.slane %v47, %v51
    %vm54 = vcmask 261120
    %v56 = vsel %vm54, %v42, 0
    %58 = vmatprep.subr.mxu0 0.0
    %59 = vmatpush1.msra.mxu0 %v43
    %60 = vmatprep.subr.mxu0 0.0
    %61 = vmatpush1.msra.mxu0 %v44
    %62 = vmatprep.subr.mxu0 0.0
    %63 = vmatpush1.msra.mxu0 %v45
    %64 = vmatprep.subr.mxu0 0.0
    %65 = vmatpush1.msra.mxu0 %v46
    %66 = vmatprep.subr.mxu0 0.0
    %67 = vmatpush1.msra.mxu0 0.0
    %68 = vmatprep.subr.mxu0 0.0
    %69 = vmatpush1.msra.mxu0 0.0
    %70 = vmatprep.subr.mxu0 0.0
    %71 = vmatpush1.msra.mxu0 0.0
    %72 = vmatprep.subr.mxu0 0.0
    %73 = vmatpush1.msra.mxu0 0.0
    %74 = vmatprep.subr.mxu0 0.0
    %75 = vmatpush1.msra.mxu0 0.0
    %76 = vmatprep.subr.mxu0 0.0
    %77 = vmatpush1.msra.mxu0 0.0
    %78 = vmatprep.subr.mxu0 0.0
    %79 = vmatpush1.msra.mxu0 0.0
    %80 = vmatprep.subr.mxu0 0.0
    %81 = vmatpush1.msra.mxu0 0.0
    %82 = vmatprep.subr.mxu0 0.0
    %83 = vmatpush1.msra.mxu0 0.0
    %84 = vmatprep.subr.mxu0 0.0
    %85 = vmatpush1.msra.mxu0 0.0
    %86 = vmatprep.subr.mxu0 0.0
    %87 = vmatpush1.msra.mxu0 0.0
    %88 = vmatprep.subr.mxu0 0.0
    %89 = vmatpush1.msra.mxu0 0.0
    %90 = vmatprep.subr.mxu0 0.0
    %91 = vmatpush1.msra.mxu0 0.0
    %92 = vmatprep.subr.mxu0 0.0
    %93 = vmatpush1.msra.mxu0 0.0
    %94 = vmatprep.subr.mxu0 0.0
    %95 = vmatpush1.msra.mxu0 0.0
    %96 = vmatprep.subr.mxu0 0.0
    %97 = vmatpush1.msra.mxu0 0.0
    %98 = vmatprep.subr.mxu0 0.0
    %99 = vmatpush1.msra.mxu0 0.0
    %100 = vmatprep.subr.mxu0 0.0
    %101 = vmatpush1.msra.mxu0 0.0
    %102 = vmatprep.subr.mxu0 0.0
    %103 = vmatpush1.msra.mxu0 0.0
    %104 = vmatprep.subr.mxu0 0.0
    %105 = vmatpush1.msra.mxu0 0.0
    %106 = vmatprep.subr.mxu0 0.0
    %107 = vmatpush1.msra.mxu0 0.0
    %108 = vmatprep.subr.mxu0 0.0
    %109 = vmatpush1.msra.mxu0 0.0
    %110 = vmatprep.subr.mxu0 0.0
    %111 = vmatpush1.msra.mxu0 0.0
    %112 = vmatprep.subr.mxu0 0.0
    %113 = vmatpush1.msra.mxu0 0.0
    %114 = vmatprep.subr.mxu0 0.0
    %115 = vmatpush1.msra.mxu0 0.0
    %116 = vmatprep.subr.mxu0 0.0
    %117 = vmatpush1.msra.mxu0 0.0
    %118 = vmatprep.subr.mxu0 0.0
    %119 = vmatpush1.msra.mxu0 0.0
    %120 = vmatprep.subr.mxu0 0.0
    %121 = vmatpush1.msra.mxu0 0.0
    %122 = vmatprep.mubr.f32.mxu0 0.0
    %123 = vmatmul.mubr.f32.gmra.mrb[0].mxu0 %v56
    %v124 = vpop.f32.mrb[0].mxu0
    %v125 = vadd.f32 %v52, %v124
    %v126 = vpop.f32.mrb[0].mxu0
    %127 = vdwg.mxu0
    %128 = vst [vmem:[#allocation2] sm:$0xff] %v125
    %vm129 = vcmask 7168
    %130 = vst.msk [vmem:[#allocation3] sm:$0xff] %vm129, -1e+30
    %131 = vst.msk [vmem:[#allocation4] sm:$0xff] %vm129, 0.0
    %132 = vst [vmem:[#allocation5] sm:$0xff] 0.0
  $region45: #{attention_forward.1} parent=0 // pred_fallthru
    _
  %v133 = vld [vmem:[%s1] sm:$0xff]
  %v134 = vld [vmem:[%s1 + $0x8] sm:$0xff]
  %v135 = vld [vmem:[%s1 + $0x10] sm:$0xff]
  %v136 = vld [vmem:[%s1 + $0x18] sm:$0xff]
  %v137 = vld [vmem:[%s1 + $0x20] sm:$0xff]
  %v138 = vld [vmem:[%s1 + $0x28] sm:$0xff]
  %v139 = vld [vmem:[%s1 + $0x30] sm:$0xff]
  %v140 = vld [vmem:[%s1 + $0x38] sm:$0xff]
  %v141 = vld [vmem:[%s4] sm:$0xff]
  %v142 = vld [vmem:[%s4 + $0x8] sm:$0xff]
  %v143 = vld [vmem:[%s4 + $0x10] sm:$0xff]
  %v144 = vld [vmem:[%s4 + $0x18] sm:$0xff]
  %v145 = vld [vmem:[%s4 + $0x20] sm:$0xff]
  %v146 = vld [vmem:[%s4 + $0x28] sm:$0xff]
  %v147 = vld [vmem:[%s4 + $0x30] sm:$0xff]
  %v148 = vld [vmem:[%s4 + $0x38] sm:$0xff]
  %vm149 = vcmask 261120
  %v151 = vsel %vm149, %v133, 0
  %v154 = vsel %vm149, %v134, 0
  %v157 = vsel %vm149, %v135, 0
  %v160 = vsel %vm149, %v136, 0
  %v163 = vsel %vm149, %v137, 0
  %v166 = vsel %vm149, %v138, 0
  %v169 = vsel %vm149, %v139, 0
  %v172 = vsel %vm149, %v140, 0
  %174 = vmatprep.subr.mxu0 %v142
  %175 = vmatpush1.msra.mxu0 %v141
  %176 = vmatprep.subr.mxu0 %v144
  %177 = vmatpush1.msra.mxu0 %v143
  %178 = vmatprep.subr.mxu0 %v146
  %179 = vmatpush1.msra.mxu0 %v145
  %180 = vmatprep.subr.mxu0 %v148
  %181 = vmatpush1.msra.mxu0 %v147
  %182 = vmatprep.subr.mxu0 0.0
  %183 = vmatpush1.msra.mxu0 0.0
  %184 = vmatprep.subr.mxu0 0.0
  %185 = vmatpush1.msra.mxu0 0.0
  %186 = vmatprep.subr.mxu0 0.0
  %187 = vmatpush1.msra.mxu0 0.0
  %188 = vmatprep.subr.mxu0 0.0
  %189 = vmatpush1.msra.mxu0 0.0
  %190 = vmatprep.subr.mxu0 0.0
  %191 = vmatpush1.msra.mxu0 0.0
  %192 = vmatprep.subr.mxu0 0.0
  %193 = vmatpush1.msra.mxu0 0.0
  %194 = vmatprep.subr.mxu0 0.0
  %195 = vmatpush1.msra.mxu0 0.0
  %196 = vmatprep.subr.mxu0 0.0
  %197 = vmatpush1.msra.mxu0 0.0
  %198 = vmatprep.subr.mxu0 0.0
  %199 = vmatpush1.msra.mxu0 0.0
  %200 = vmatprep.subr.mxu0 0.0
  %201 = vmatpush1.msra.mxu0 0.0
  %202 = vmatprep.subr.mxu0 0.0
  %203 = vmatpush1.msra.mxu0 0.0
  %204 = vmatprep.subr.mxu0 0.0
  %205 = vmatpush1.msra.mxu0 0.0
  %206 = vmatprep.subr.mxu0 0.0
  %207 = vmatpush1.msra.mxu0 0.0
  %208 = vmatprep.subr.mxu0 0.0
  %209 = vmatpush1.msra.mxu0 0.0
  %210 = vmatprep.subr.mxu0 0.0
  %211 = vmatpush1.msra.mxu0 0.0
  %212 = vmatprep.subr.mxu0 0.0
  %213 = vmatpush1.msra.mxu0 0.0
  %214 = vmatprep.subr.mxu0 0.0
  %215 = vmatpush1.msra.mxu0 0.0
  %216 = vmatprep.subr.mxu0 0.0
  %217 = vmatpush1.msra.mxu0 0.0
  %218 = vmatprep.subr.mxu0 0.0
  %219 = vmatpush1.msra.mxu0 0.0
  %220 = vmatprep.subr.mxu0 0.0
  %221 = vmatpush1.msra.mxu0 0.0
  %222 = vmatprep.subr.mxu0 0.0
  %223 = vmatpush1.msra.mxu0 0.0
  %224 = vmatprep.subr.mxu0 0.0
  %225 = vmatpush1.msra.mxu0 0.0
  %226 = vmatprep.subr.mxu0 0.0
  %227 = vmatpush1.msra.mxu0 0.0
  %228 = vmatprep.subr.mxu0 0.0
  %229 = vmatpush1.msra.mxu0 0.0
  %230 = vmatprep.subr.mxu0 0.0
  %231 = vmatpush1.msra.mxu0 0.0
  %232 = vmatprep.subr.mxu0 0.0
  %233 = vmatpush1.msra.mxu0 0.0
  %234 = vmatprep.subr.mxu0 0.0
  %235 = vmatpush1.msra.mxu0 0.0
  %236 = vmatprep.subr.mxu0 0.0
  %237 = vmatpush1.msra.mxu0 0.0
  %238 = vmatprep.mubr.f32.mxu0 0.0
  %239 = vmatmul.mubr.f32.gmra.mrb[0].mxu0 %v151
  %v240 = vpop.f32.mrb[0].mxu0
  %v241 = vadd.f32 0.0, %v240
  %v242 = vpop.f32.mrb[0].mxu0
  %v243 = vadd.f32 0.0, %v242
  %244 = vmatprep.mubr.f32.mxu0 0.0
  %245 = vmatmul.mubr.f32.gmra.mrb[0].mxu0 %v154
  %v246 = vpop.f32.mrb[0].mxu0
  %v247 = vadd.f32 0.0, %v246
  %v248 = vpop.f32.mrb[0].mxu0
  %v249 = vadd.f32 0.0, %v248
  %250 = vmatprep.mubr.f32.mxu0 0.0
  %251 = vmatmul.mubr.f32.gmra.mrb[0].mxu0 %v157
  %v252 = vpop.f32.mrb[0].mxu0
  %v253 = vadd.f32 0.0, %v252
  %v254 = vpop.f32.mrb[0].mxu0
  %v255 = vadd.f32 0.0, %v254
  %256 = vmatprep.mubr.f32.mxu0 0.0
  %257 = vmatmul.mubr.f32.gmra.mrb[0].mxu0 %v160
  %v258 = vpop.f32.mrb[0].mxu0
  %v259 = vadd.f32 0.0, %v258
  %v260 = vpop.f32.mrb[0].mxu0
  %v261 = vadd.f32 0.0, %v260
  %262 = vmatprep.mubr.f32.mxu0 0.0
  %263 = vmatmul.mubr.f32.gmra.mrb[0].mxu0 %v163
  %v264 = vpop.f32.mrb[0].mxu0
  %v265 = vadd.f32 0.0, %v264
  %v266 = vpop.f32.mrb[0].mxu0
  %v267 = vadd.f32 0.0, %v266
  %268 = vmatprep.mubr.f32.mxu0 0.0
  %269 = vmatmul.mubr.f32.gmra.mrb[0].mxu0 %v166
  %v270 = vpop.f32.mrb[0].mxu0
  %v271 = vadd.f32 0.0, %v270
  %v272 = vpop.f32.mrb[0].mxu0
  %v273 = vadd.f32 0.0, %v272
  %274 = vmatprep.mubr.f32.mxu0 0.0
  %275 = vmatmul.mubr.f32.gmra.mrb[0].mxu0 %v169
  %v276 = vpop.f32.mrb[0].mxu0
  %v277 = vadd.f32 0.0, %v276
  %v278 = vpop.f32.mrb[0].mxu0
  %v279 = vadd.f32 0.0, %v278
  %280 = vmatprep.mubr.f32.mxu0 0.0
  %281 = vmatmul.mubr.f32.gmra.mrb[0].mxu0 %v172
  %v282 = vpop.f32.mrb[0].mxu0
  %v283 = vadd.f32 0.0, %v282
  %v284 = vpop.f32.mrb[0].mxu0
  %v285 = vadd.f32 0.0, %v284
  %286 = vdwg.mxu0
  %v287 = vld [vmem:[%s5] sm:$0x3]
  %v289 = vlaneseq
  %v290 = vshrl.u32 %v289, 7
  %v291 = vsub.s32 0, %v290
  %v292 = vrot.slane %v287, %v291
  %v293 = vlaneseq
  %v294 = vshrl.u32 %v293, 7
  %v295 = vsub.s32 1, %v294
  %v296 = vrot.slane %v287, %v295
  %v299 = vadd.f32 %v241, %v292
  %v300 = vadd.f32 %v243, %v296
  %v301 = vadd.f32 %v247, %v292
  %v302 = vadd.f32 %v249, %v296
  %v303 = vadd.f32 %v253, %v292
  %v304 = vadd.f32 %v255, %v296
  %v305 = vadd.f32 %v259, %v292
  %v306 = vadd.f32 %v261, %v296
  %v307 = vadd.f32 %v265, %v292
  %v308 = vadd.f32 %v267, %v296
  %v309 = vadd.f32 %v271, %v292
  %v310 = vadd.f32 %v273, %v296
  %v311 = vadd.f32 %v277, %v292
  %v312 = vadd.f32 %v279, %v296
  %v313 = vadd.f32 %v283, %v292
  %v314 = vadd.f32 %v285, %v296
  %v315 = vld [vmem:[#allocation2] sm:$0xff]
  %v317 = vcombine.high %v315, %v315
  %v319 = vunpack.c.l.s4 1966171168
  %v320 = vunpack.c.0.s8 %v319
  %v321 = vlaneseq
  %v322 = vshrl.u32 %v321, 7
  %v323 = vsub.s32 %v320, %v322
  %v324 = vrot.slane %v315, %v323
  %v326 = vunpack.c.l.s4 1966171168
  %v327 = vunpack.c.0.s8 %v326
  %v328 = vlaneseq
  %v329 = vshrl.u32 %v328, 7
  %v330 = vsub.s32 %v327, %v329
  %v331 = vrot.slane %v317, %v330
  %v332 = vcombine.high %v324, %v324
  %v333 = vcombine.high %v331, %v331
  %v335 = vunpack.c.l.s4 1966171168
  %v336 = vunpack.c.0.s8 %v335
  %v337 = vlaneseq
  %v338 = vshrl.u32 %v337, 7
  %v339 = vsub.s32 %v336, %v338
  %v340 = vrot.slane %v324, %v339
  %v342 = vunpack.c.l.s4 1966171168
  %v343 = vunpack.c.0.s8 %v342
  %v344 = vlaneseq
  %v345 = vshrl.u32 %v344, 7
  %v346 = vsub.s32 %v343, %v345
  %v347 = vrot.slane %v331, %v346
  %v349 = vunpack.c.l.s4 1966171168
  %v350 = vunpack.c.0.s8 %v349
  %v351 = vlaneseq
  %v352 = vshrl.u32 %v351, 7
  %v353 = vsub.s32 %v350, %v352
  %v354 = vrot.slane %v332, %v353
  %v356 = vunpack.c.l.s4 1966171168
  %v357 = vunpack.c.0.s8 %v356
  %v358 = vlaneseq
  %v359 = vshrl.u32 %v358, 7
  %v360 = vsub.s32 %v357, %v359
  %v361 = vrot.slane %v333, %v360
  %v362 = vcombine.high %v340, %v340
  %v363 = vcombine.high %v347, %v347
  %v364 = vcombine.high %v354, %v354
  %v365 = vcombine.high %v361, %v361
  %v366 = vlaneseq
  %v367 = vshrl.u32 %v366, 7
  %v368 = vsub.s32 0, %v367
  %v369 = vrot.slane %v340, %v368
  %v370 = vlaneseq
  %v371 = vshrl.u32 %v370, 7
  %v372 = vsub.s32 0, %v371
  %v373 = vrot.slane %v354, %v372
  %v374 = vlaneseq
  %v375 = vshrl.u32 %v374, 7
  %v376 = vsub.s32 0, %v375
  %v377 = vrot.slane %v362, %v376
  %v378 = vlaneseq
  %v379 = vshrl.u32 %v378, 7
  %v380 = vsub.s32 0, %v379
  %v381 = vrot.slane %v364, %v380
  %v382 = vlaneseq
  %v383 = vshrl.u32 %v382, 7
  %v384 = vsub.s32 0, %v383
  %v385 = vrot.slane %v347, %v384
  %v386 = vlaneseq
  %v387 = vshrl.u32 %v386, 7
  %v388 = vsub.s32 0, %v387
  %v389 = vrot.slane %v361, %v388
  %v390 = vlaneseq
  %v391 = vshrl.u32 %v390, 7
  %v392 = vsub.s32 0, %v391
  %v393 = vrot.slane %v363, %v392
  %v394 = vlaneseq
  %v395 = vshrl.u32 %v394, 7
  %v396 = vsub.s32 0, %v395
  %v397 = vrot.slane %v365, %v396
  %v406 = vadd.f32 %v369, %v299
  %v407 = vadd.f32 %v373, %v301
  %v408 = vadd.f32 %v377, %v303
  %v409 = vadd.f32 %v381, %v305
  %v410 = vadd.f32 %v385, %v307
  %v411 = vadd.f32 %v389, %v309
  %v412 = vadd.f32 %v393, %v311
  %v413 = vadd.f32 %v397, %v313
  %v414 = vtanh.pop %v406
  %v415 = vtanh.pop %v407
  %v416 = vtanh.pop %v408
  %v417 = vtanh.pop %v409
  %v418 = vtanh.pop %v410
  %v419 = vtanh.pop %v411
  %v420 = vtanh.pop %v412
  %v421 = vtanh.pop %v413
  %v422 = vld [vmem:[%s6] sm:$0x1]
  %v424 = vlaneseq
  %v425 = vshrl.u32 %v424, 7
  %v426 = vsub.s32 0, %v425
  %v427 = vrot.slane %v422, %v426
  %v429 = vmul.f32 %v414, %v427
  %v430 = vmul.f32 %v415, %v427
  %v431 = vmul.f32 %v416, %v427
  %v432 = vmul.f32 %v417, %v427
  %v433 = vmul.f32 %v418, %v427
  %v434 = vmul.f32 %v419, %v427
  %v435 = vmul.f32 %v420, %v427
  %v436 = vmul.f32 %v421, %v427
  %437 = vadd.xlane.f32.xlu0 %v429
  %v438 = vpop.xlane.xlu0 %437
  %439 = vadd.xlane.f32.xlu0 %v430
  %v440 = vpop.xlane.xlu0 %439
  %441 = vadd.xlane.f32.xlu0 %v431
  %v442 = vpop.xlane.xlu0 %441
  %443 = vadd.xlane.f32.xlu0 %v432
  %v444 = vpop.xlane.xlu0 %443
  %445 = vadd.xlane.f32.xlu0 %v433
  %v446 = vpop.xlane.xlu0 %445
  %447 = vadd.xlane.f32.xlu0 %v434
  %v448 = vpop.xlane.xlu0 %447
  %449 = vadd.xlane.f32.xlu0 %v435
  %v450 = vpop.xlane.xlu0 %449
  %451 = vadd.xlane.f32.xlu0 %v436
  %v452 = vpop.xlane.xlu0 %451
  %s453 = sld [smem:[#allocation6]]
  %v454 = vstv %s453
  %v455 = vadd.f32 %v438, %v454
  %v456 = vadd.f32 %v440, %v454
  %v457 = vadd.f32 %v442, %v454
  %v458 = vadd.f32 %v444, %v454
  %v459 = vadd.f32 %v446, %v454
  %v460 = vadd.f32 %v448, %v454
  %v461 = vadd.f32 %v450, %v454
  %v462 = vadd.f32 %v452, %v454
  %s463 = smul.u32 0, 8
  %v464 = vlaneseq
  %v465 = vand.u32 %v464, 127
  %v466 = vstv %s463
  %v467 = vadd.s32 %v466, %v465
  %vm468 = vcmp.lt.s32.totalorder %v467, 8
  %v477 = vlaneseq
  %v478 = vshrl.u32 %v477, 7
  %v479 = vsub.s32 %v465, %v478
  %v480 = vrot.slane %v455, %v479
  %v481 = vlaneseq
  %v482 = vshrl.u32 %v481, 7
  %v483 = vsub.s32 %v465, %v482
  %v484 = vrot.slane %v456, %v483
  %v485 = vlaneseq
  %v486 = vshrl.u32 %v485, 7
  %v487 = vsub.s32 %v465, %v486
  %v488 = vrot.slane %v457, %v487
  %v489 = vlaneseq
  %v490 = vshrl.u32 %v489, 7
  %v491 = vsub.s32 %v465, %v490
  %v492 = vrot.slane %v458, %v491
  %v493 = vlaneseq
  %v494 = vshrl.u32 %v493, 7
  %v495 = vsub.s32 %v465, %v494
  %v496 = vrot.slane %v459, %v495
  %v497 = vlaneseq
  %v498 = vshrl.u32 %v497, 7
  %v499 = vsub.s32 %v465, %v498
  %v500 = vrot.slane %v460, %v499
  %v501 = vlaneseq
  %v502 = vshrl.u32 %v501, 7
  %v503 = vsub.s32 %v465, %v502
  %v504 = vrot.slane %v461, %v503
  %v505 = vlaneseq
  %v506 = vshrl.u32 %v505, 7
  %v507 = vsub.s32 %v465, %v506
  %v508 = vrot.slane %v462, %v507
  %vm509 = vcmask 1041409
  %v510 = vsel %vm509, %v484, %v480
  %vm511 = vcmask 1042434
  %v512 = vsel %vm511, %v488, %v510
  %vm513 = vcmask 1043459
  %v514 = vsel %vm513, %v492, %v512
  %vm515 = vcmask 1044484
  %v516 = vsel %vm515, %v496, %v514
  %vm517 = vcmask 1045509
  %v518 = vsel %vm517, %v500, %v516
  %vm519 = vcmask 1046534
  %v520 = vsel %vm519, %v504, %v518
  %vm521 = vcmask 1047559
  %v522 = vsel %vm521, %v508, %v520
  %v524 = vsel %vm468, %v522, -1e+30
  %s525 = scalar_lea.vmem %s11, %s463
  %vm526 = vcmask 64512
  %527 = vst.msk [vmem:[%s525] sm:$0xff] %vm526, %v524
  %v528 = vld [vmem:[#allocation3] sm:$0xff]
  %v529 = vsel %vm526, %v524, -inf
  %530 = vmax.xlane.f32.xlu0 %v529
  %v531 = vpop.xlane.xlu0 %530
  %v532 = vmax.f32 %v528, %v531
  %v533 = vsub.f32 %v528, %v532
  %v534 = vmul.f32 %v533, 1.442695
  %v535 = vpow.pop %v534
  %537 = vset.pattern.permute.xlu0 0
  %538 = vperm.xlu0 %537, %v532
  %v539 = vpop.permute.xlu0 %538
  %v541 = vsub.f32 %v524, %v539
  %v542 = vmul.f32 %v541, 1.442695
  %v543 = vpow.pop %v542
  %v544 = vld [vmem:[#allocation4] sm:$0xff]
  %v545 = vmul.f32 %v535, %v544
  %v546 = vsel %vm526, %v543, 0.0
  %547 = vadd.xlane.f32.xlu0 %v546
  %v548 = vpop.xlane.xlu0 %547
  %v549 = vadd.f32 %v545, %v548
  %vm550 = vcmask 7168
  %551 = vst.msk [vmem:[#allocation4] sm:$0xff] %vm550, %v549
  %v552 = vld [vmem:[#allocation5] sm:$0xff]
  %554 = vset.pattern.permute.xlu0 0
  %555 = vperm.xlu0 %554, %v535
  %v556 = vpop.permute.xlu0 %555
  %v558 = vmul.f32 %v556, %v552
  %v559 = vlaneseq
  %v560 = vshrl.u32 %v559, 7
  %v561 = vsub.s32 0, %v560
  %v562 = vrot.slane %v543, %v561
  %564 = vbcast.lane.b32.xlu0 %v562, 256
  %v565 = vpop.permute.xlu0 %564
  %v566 = vlaneseq
  %v567 = vshrl.u32 %v566, 7
  %v568 = vsub.s32 1, %v567
  %v569 = vrot.slane %v543, %v568
  %571 = vbcast.lane.b32.xlu0 %v569, 256
  %v572 = vpop.permute.xlu0 %571
  %v573 = vlaneseq
  %v574 = vshrl.u32 %v573, 7
  %v575 = vsub.s32 2, %v574
  %v576 = vrot.slane %v543, %v575
  %578 = vbcast.lane.b32.xlu0 %v576, 256
  %v579 = vpop.permute.xlu0 %578
  %v580 = vlaneseq
  %v581 = vshrl.u32 %v580, 7
  %v582 = vsub.s32 3, %v581
  %v583 = vrot.slane %v543, %v582
  %585 = vbcast.lane.b32.xlu0 %v583, 256
  %v586 = vpop.permute.xlu0 %585
  %v587 = vlaneseq
  %v588 = vshrl.u32 %v587, 7
  %v589 = vsub.s32 4, %v588
  %v590 = vrot.slane %v543, %v589
  %592 = vbcast.lane.b32.xlu0 %v590, 256
  %v593 = vpop.permute.xlu0 %592
  %v594 = vlaneseq
  %v595 = vshrl.u32 %v594, 7
  %v596 = vsub.s32 5, %v595
  %v597 = vrot.slane %v543, %v596
  %599 = vbcast.lane.b32.xlu0 %v597, 256
  %v600 = vpop.permute.xlu0 %599
  %v601 = vlaneseq
  %v602 = vshrl.u32 %v601, 7
  %v603 = vsub.s32 6, %v602
  %v604 = vrot.slane %v543, %v603
  %606 = vbcast.lane.b32.xlu0 %v604, 256
  %v607 = vpop.permute.xlu0 %606
  %v608 = vlaneseq
  %v609 = vshrl.u32 %v608, 7
  %v610 = vsub.s32 7, %v609
  %v611 = vrot.slane %v543, %v610
  %613 = vbcast.lane.b32.xlu0 %v611, 256
  %v614 = vpop.permute.xlu0 %613
  %v615 = vmul.f32 %v565, %v300
  %v616 = vmul.f32 %v572, %v302
  %v617 = vmul.f32 %v579, %v304
  %v618 = vmul.f32 %v586, %v306
  %v619 = vmul.f32 %v593, %v308
  %v620 = vmul.f32 %v600, %v310
  %v621 = vmul.f32 %v607, %v312
  %v622 = vmul.f32 %v614, %v314
  %v623 = vrot.slane %v615, 4
  %v624 = vadd.f32 %v615, %v623
  %v625 = vrot.slane %v624, 2
  %v626 = vadd.f32 %v624, %v625
  %v627 = vrot.slane %v626, 1
  %v628 = vadd.f32 %v626, %v627
  %v629 = vrot.slane %v616, 4
  %v630 = vadd.f32 %v616, %v629
  %v631 = vrot.slane %v630, 2
  %v632 = vadd.f32 %v630, %v631
  %v633 = vrot.slane %v632, 1
  %v634 = vadd.f32 %v632, %v633
  %v635 = vrot.slane %v617, 4
  %v636 = vadd.f32 %v617, %v635
  %v637 = vrot.slane %v636, 2
  %v638 = vadd.f32 %v636, %v637
  %v639 = vrot.slane %v638, 1
  %v640 = vadd.f32 %v638, %v639
  %v641 = vrot.slane %v618, 4
  %v642 = vadd.f32 %v618, %v641
  %v643 = vrot.slane %v642, 2
  %v644 = vadd.f32 %v642, %v643
  %v645 = vrot.slane %v644, 1
  %v646 = vadd.f32 %v644, %v645
  %v647 = vrot.slane %v619, 4
  %v648 = vadd.f32 %v619, %v647
  %v649 = vrot.slane %v648, 2
  %v650 = vadd.f32 %v648, %v649
  %v651 = vrot.slane %v650, 1
  %v652 = vadd.f32 %v650, %v651
  %v653 = vrot.slane %v620, 4
  %v654 = vadd.f32 %v620, %v653
  %v655 = vrot.slane %v654, 2
  %v656 = vadd.f32 %v654, %v655
  %v657 = vrot.slane %v656, 1
  %v658 = vadd.f32 %v656, %v657
  %v659 = vrot.slane %v621, 4
  %v660 = vadd.f32 %v621, %v659
  %v661 = vrot.slane %v660, 2
  %v662 = vadd.f32 %v660, %v661
  %v663 = vrot.slane %v662, 1
  %v664 = vadd.f32 %v662, %v663
  %v665 = vrot.slane %v622, 4
  %v666 = vadd.f32 %v622, %v665
  %v667 = vrot.slane %v666, 2
  %v668 = vadd.f32 %v666, %v667
  %v669 = vrot.slane %v668, 1
  %v670 = vadd.f32 %v668, %v669
  %v679 = vsel %vm509, %v634, %v628
  %v680 = vsel %vm511, %v640, %v679
  %v681 = vsel %vm513, %v646, %v680
  %v682 = vsel %vm515, %v652, %v681
  %v683 = vsel %vm517, %v658, %v682
  %v684 = vsel %vm519, %v664, %v683
  %v685 = vsel %vm521, %v670, %v684
  %v687 = vadd.f32 %v558, %v685
  %688 = vst [vmem:[#allocation5] sm:$0xff] %v687
  %689 = vst.msk [vmem:[#allocation3] sm:$0xff] %vm550, %v532
  // Predicated region
  $region46: #{attention_forward.1} parent=0 // pred_check
    %p690 = pneg %p38
  $region47: #{attention_forward.1} parent=0 // pred_check_branch
    %692 = sbr.rel (%p690) target = $region49
  $region48: #{attention_forward.1} parent=0 // pred_region
    %v693 = vld [vmem:[#allocation4] sm:$0xff]
    %v694 = vrcp.pop %v693
    %v695 = vmul.f32 1.0, %v694
    %v696 = vld [vmem:[#allocation5] sm:$0xff]
    %698 = vset.pattern.permute.xlu0 0
    %699 = vperm.xlu0 %698, %v695
    %v700 = vpop.permute.xlu0 %699
    %v702 = vmul.f32 %v696, %v700
    %v703 = vld [vmem:[%s7] sm:$0xff]
    %v704 = vld [vmem:[%s7 + $0x8] sm:$0xff]
    %v705 = vld [vmem:[%s7 + $0x10] sm:$0xff]
    %v706 = vld [vmem:[%s7 + $0x18] sm:$0xff]
    %v707 = vld [vmem:[%s7 + $0x20] sm:$0xff]
    %v708 = vld [vmem:[%s7 + $0x28] sm:$0xff]
    %v709 = vld [vmem:[%s7 + $0x30] sm:$0xff]
    %v710 = vld [vmem:[%s7 + $0x38] sm:$0xff]
    %v711 = vld [vmem:[%s7 + $0x40] sm:$0xff]
    %v712 = vld [vmem:[%s7 + $0x48] sm:$0xff]
    %v713 = vld [vmem:[%s7 + $0x50] sm:$0xff]
    %v714 = vld [vmem:[%s7 + $0x58] sm:$0xff]
    %v715 = vld [vmem:[%s7 + $0x60] sm:$0xff]
    %v716 = vld [vmem:[%s7 + $0x68] sm:$0xff]
    %v717 = vld [vmem:[%s7 + $0x70] sm:$0xff]
    %v718 = vld [vmem:[%s7 + $0x78] sm:$0xff]
    %v719 = vld [vmem:[%s8] sm:$0x1]
    %v721 = vlaneseq
    %v722 = vshrl.u32 %v721, 7
    %v723 = vsub.s32 0, %v722
    %v724 = vrot.slane %v719, %v723
    %726 = vmatprep.subr.mxu0 0.0
    %727 = vmatpush1.msra.mxu0 %v703
    %728 = vmatprep.subr.mxu0 0.0
    %729 = vmatpush1.msra.mxu0 %v704
    %730 = vmatprep.subr.mxu0 0.0
    %731 = vmatpush1.msra.mxu0 %v705
    %732 = vmatprep.subr.mxu0 0.0
    %733 = vmatpush1.msra.mxu0 %v706
    %734 = vmatprep.subr.mxu0 0.0
    %735 = vmatpush1.msra.mxu0 %v707
    %736 = vmatprep.subr.mxu0 0.0
    %737 = vmatpush1.msra.mxu0 %v708
    %738 = vmatprep.subr.mxu0 0.0
    %739 = vmatpush1.msra.mxu0 %v709
    %740 = vmatprep.subr.mxu0 0.0
    %741 = vmatpush1.msra.mxu0 %v710
    %742 = vmatprep.subr.mxu0 0.0
    %743 = vmatpush1.msra.mxu0 %v711
    %744 = vmatprep.subr.mxu0 0.0
    %745 = vmatpush1.msra.mxu0 %v712
    %746 = vmatprep.subr.mxu0 0.0
    %747 = vmatpush1.msra.mxu0 %v713
    %748 = vmatprep.subr.mxu0 0.0
    %749 = vmatpush1.msra.mxu0 %v714
    %750 = vmatprep.subr.mxu0 0.0
    %751 = vmatpush1.msra.mxu0 %v715
    %752 = vmatprep.subr.mxu0 0.0
    %753 = vmatpush1.msra.mxu0 %v716
    %754 = vmatprep.subr.mxu0 0.0
    %755 = vmatpush1.msra.mxu0 %v717
    %756 = vmatprep.subr.mxu0 0.0
    %757 = vmatpush1.msra.mxu0 %v718
    %758 = vmatprep.subr.mxu0 0.0
    %759 = vmatpush1.msra.mxu0 0.0
    %760 = vmatprep.subr.mxu0 0.0
    %761 = vmatpush1.msra.mxu0 0.0
    %762 = vmatprep.subr.mxu0 0.0
    %763 = vmatpush1.msra.mxu0 0.0
    %764 = vmatprep.subr.mxu0 0.0
    %765 = vmatpush1.msra.mxu0 0.0
    %766 = vmatprep.subr.mxu0 0.0
    %767 = vmatpush1.msra.mxu0 0.0
    %768 = vmatprep.subr.mxu0 0.0
    %769 = vmatpush1.msra.mxu0 0.0
    %770 = vmatprep.subr.mxu0 0.0
    %771 = vmatpush1.msra.mxu0 0.0
    %772 = vmatprep.subr.mxu0 0.0
    %773 = vmatpush1.msra.mxu0 0.0
    %774 = vmatprep.subr.mxu0 0.0
    %775 = vmatpush1.msra.mxu0 0.0
    %776 = vmatprep.subr.mxu0 0.0
    %777 = vmatpush1.msra.mxu0 0.0
    %778 = vmatprep.subr.mxu0 0.0
    %779 = vmatpush1.msra.mxu0 0.0
    %780 = vmatprep.subr.mxu0 0.0
    %781 = vmatpush1.msra.mxu0 0.0
    %782 = vmatprep.subr.mxu0 0.0
    %783 = vmatpush1.msra.mxu0 0.0
    %784 = vmatprep.subr.mxu0 0.0
    %785 = vmatpush1.msra.mxu0 0.0
    %786 = vmatprep.subr.mxu0 0.0
    %787 = vmatpush1.msra.mxu0 0.0
    %788 = vmatprep.subr.mxu0 0.0
    %789 = vmatpush1.msra.mxu0 0.0
    %790 = vmatprep.mubr.f32.mxu0 0.0
    %791 = vmatmul.mubr.f32.gmra.mrb[0].mxu0 %v702
    %v792 = vpop.f32.mrb[0].mxu0
    %v793 = vadd.f32 %v724, %v792
    %v794 = vpop.f32.mrb[0].mxu0
    %795 = vdwg.mxu0
    %vm796 = vcmask 130048
    %797 = vst.msk [vmem:[%s10] sm:$0xff] %vm796, %v793
    %v798 = vld [vmem:[%s11] sm:$0xff]
    %v799 = vld [vmem:[#allocation3] sm:$0xff]
    %801 = vset.pattern.permute.xlu0 0
    %802 = vperm.xlu0 %801, %v799
    %v803 = vpop.permute.xlu0 %802
    %v805 = vsub.f32 %v798, %v803
    %v806 = vmul.f32 %v805, 1.442695
    %v807 = vpow.pop %v806
    %v808 = vmul.f32 %v807, %v700
    %809 = vst.msk [vmem:[%s11] sm:$0xff] %vm526, %v808
  $region49: #{attention_forward.1} parent=0 // pred_fallthru
    _
  // Predicated region
  $region50: #{attention_forward.1} parent=0 // pred_check
    _
  $region51: #{attention_forward.1} parent=0 // pred_check_branch
    %811 = sbr.rel (0) target = $region53
  $region52: #{attention_forward.1} parent=0 // pred_region
    _
  $region53: #{attention_forward.1} parent=0 // pred_fallthru
    _
  // Predicated region
  $region54: #{attention_forward.1} parent=0 // pred_check
    _
  $region55: #{attention_forward.1} parent=0 // pred_check_branch
    %813 = sbr.rel (0) target = $region57
  $region56: #{attention_forward.1} parent=0 // pred_region
    _
  $region57: #{attention_forward.1} parent=0 // pred_fallthru
    _
  // Predicated region
  $region58: #{attention_forward.1} parent=0 // pred_check
    _
  $region59: #{attention_forward.1} parent=0 // pred_check_branch
    %815 = sbr.rel (0) target = $region61
  $region60: #{attention_forward.1} parent=0 // pred_region
    _
  $region61: #{attention_forward.1} parent=0 // pred_fallthru
    _
  // Predicated region
  $region62: #{attention_forward.1} parent=0 // pred_check
    _
  $region63: #{attention_forward.1} parent=0 // pred_check_branch
    %817 = sbr.rel (0) target = $region65
  $region64: #{attention_forward.1} parent=0 // pred_region
    _
  $region65: #{attention_forward.1} parent=0 // pred_fallthru
    _

</llo_original>
